<compile_context>
chip_gen: v6e
topology: v6e:2x2x1
jax: 0.10.0
libtpu: 0.0.40
codegen_flags: <defaults>
</compile_context>

<pallas_src>
import jax
import jax.numpy as jnp
from jax import lax
from jax.experimental import pallas as pl
from jax.experimental.pallas import tpu as pltpu


def dqn_mlp_kernel(obs_ref, cmd_ref, w1o_ref, w1c_ref, b1_ref, w2_ref, b2_ref, o_ref):
    # obs: [TB, obs_size]   cmd: [TB, cmd_size]    (natural layout, batch on sublanes)
    # w1o: [hid, obs_size]  w1c: [hid, cmd_size]   b1: [hid, 1]
    # w2 : [hid, 1]         b2 : (1, 1) scalar in SMEM
    # o  : [1, TB]          (batch on lanes -> unmasked lane-dense stores)
    contract_last = (((1,), (1,)), ((), ()))       # A[:, k] * B[:, k] -> [hid, TB]
    h = (lax.dot_general(w1o_ref[...], obs_ref[...], dimension_numbers=contract_last,
                         preferred_element_type=jnp.float32)
         + lax.dot_general(w1c_ref[...], cmd_ref[...], dimension_numbers=contract_last,
                           preferred_element_type=jnp.float32)
         + b1_ref[...])                                     # [hid, TB]  (MXU + VPU)
    h = jnp.maximum(h, 0.0)                                 # ReLU       (VPU)
    # hid -> 1 as broadcast-mul + sublane reduce (VPU + XLU), not a 1-col MXU matmul.
    q = jnp.sum(h * w2_ref[...], axis=0, keepdims=True) + b2_ref[0, 0]   # [1, TB]
    o_ref[...] = q.astype(o_ref.dtype)


def _pick_batch_tiling(batch, hid):
    # Lane alignment first (output tile is (1, TB) -> TB must be a multiple of 128).
    b_pad = ((batch + 127) // 128) * 128
    # Cap TB by the vreg footprint of the live h = [hid, TB] f32 intermediate:
    # (hid/8)*(TB/128) vregs; keep it at <= 32 of the 64-entry vreg file.
    tb_vreg_cap = max(128, ((32 * 8 * 128) // max(hid, 1)) // 128 * 128)
    tb = min(1024, tb_vreg_cap, b_pad)
    # v7x megacore: keep >= 2 grid steps whenever there is enough batch.
    if b_pad >= 256 and b_pad // tb < 2:
        tb = max(128, (b_pad // 2) // 128 * 128)
    # Keep b_pad an exact multiple of TB (no partial-block surprises).
    b_pad = ((b_pad + tb - 1) // tb) * tb
    return b_pad, tb


def dqn_forward(obs, cmd, params):
    """Equivalent of DQNModel.forward(obs, cmd) -> [B, 1] q-values."""
    w1o, w1c, b1, w2, b2 = params
    B, obs_size = obs.shape
    cmd_size = cmd.shape[1]
    hid = w1o.shape[0]

    B_pad, TB = _pick_batch_tiling(B, hid)
    grid = (B_pad // TB,)

    # Inputs keep their natural [B, feat] layout (no transpose/relayout HBM pass);
    # only zero-pad the batch dim when it is not already tile-aligned.
    if B != B_pad:
        obs = jnp.zeros((B_pad, obs_size), obs.dtype).at[:B].set(obs)
        cmd = jnp.zeros((B_pad, cmd_size), cmd.dtype).at[:B].set(cmd)

    in_f = obs_size + cmd_size
    flops = 2 * B_pad * in_f * hid + 3 * B_pad * hid
    bytes_accessed = (obs.dtype.itemsize * B_pad * in_f          # activations in
                      + w1o.dtype.itemsize * hid * (in_f + 2)    # weights + biases
                      + 4 * (B_pad + 1))                         # q out + b2

    out = pl.pallas_call(
        dqn_mlp_kernel,
        out_shape=jax.ShapeDtypeStruct((1, B_pad), jnp.float32),
        grid=grid,
        in_specs=[
            pl.BlockSpec((TB, obs_size), lambda i: (i, 0)),      # natural layout
            pl.BlockSpec((TB, cmd_size), lambda i: (i, 0)),
            pl.BlockSpec((hid, obs_size), lambda i: (0, 0)),     # weights stay resident
            pl.BlockSpec((hid, cmd_size), lambda i: (0, 0)),
            pl.BlockSpec((hid, 1), lambda i: (0, 0)),
            pl.BlockSpec((hid, 1), lambda i: (0, 0)),
            pl.BlockSpec(memory_space=pltpu.MemorySpace.SMEM),   # b2 scalar
        ],
        out_specs=pl.BlockSpec((1, TB), lambda i: (0, i)),       # lane-dense output
        compiler_params=pltpu.CompilerParams(
            dimension_semantics=("parallel",)),                  # megacore on v7x
        cost_estimate=pl.CostEstimate(
            flops=flops, transcendentals=0, bytes_accessed=bytes_accessed),
    )(obs, cmd, w1o, w1c, b1, w2, b2)

    return out[0, :B].reshape(B, 1)


def init_params(key, obs_size, cmd_size, hid_size):
    """Deterministic params matching nn.Linear init, stored in kernel layout."""
    k1, k2, k3, k4 = jax.random.split(key, 4)
    in_f = obs_size + cmd_size
    s1 = 1.0 / jnp.sqrt(in_f)
    s2 = 1.0 / jnp.sqrt(hid_size)
    w1 = jax.random.uniform(k1, (hid_size, in_f), jnp.float32, -s1, s1)  # torch [out, in]
    b1 = jax.random.uniform(k2, (hid_size,), jnp.float32, -s1, s1)
    w2 = jax.random.uniform(k3, (1, hid_size), jnp.float32, -s2, s2)
    b2 = jax.random.uniform(k4, (1,), jnp.float32, -s2, s2)
    # Kernel layout: W1 split at the obs/cmd boundary (fuses the concat),
    # column vectors for b1/w2, (1,1) SMEM scalar for b2.
    return (w1[:, :obs_size], w1[:, obs_size:],
            b1.reshape(hid_size, 1), w2.T, b2.reshape(1, 1))


if __name__ == "__main__":
    obs_size, cmd_size, hid_size = 16, 16, 32
    batch = 2

    key = jax.random.PRNGKey(0)
    kp, ko, kc = jax.random.split(key, 3)
    params = init_params(kp, obs_size, cmd_size, hid_size)
    obs = jax.random.normal(ko, (batch, obs_size), jnp.float32)
    cmd = jax.random.normal(kc, (batch, cmd_size), jnp.float32)

    q = dqn_forward(obs, cmd, params)
    jax.block_until_ready(q)

    # Pure-JAX reference of the same forward pass (torch semantics).
    w1o, w1c, b1, w2, b2 = params
    x = jnp.concatenate([obs, cmd], axis=1)
    w1_full = jnp.concatenate([w1o, w1c], axis=1)            # [hid, in_f]
    ref = jnp.maximum(x @ w1_full.T + b1.T, 0.0) @ w2 + b2   # [B, 1]
    assert q.shape == (batch, 1)
    assert jnp.allclose(q, ref, atol=1e-5, rtol=1e-5)

    print("KERNEL_OK")
</pallas_src>

<mosaic_0001>
module attributes {stable_mosaic.version = 11 : i64} {
  func.func @dqn_mlp_kernel(%arg0: i32, %arg1: memref<128x16xf32, #tpu.memory_space<vmem>>, %arg2: memref<128x16xf32, #tpu.memory_space<vmem>>, %arg3: memref<32x16xf32, #tpu.memory_space<vmem>>, %arg4: memref<32x16xf32, #tpu.memory_space<vmem>>, %arg5: memref<32x1xf32, #tpu.memory_space<vmem>>, %arg6: memref<32x1xf32, #tpu.memory_space<vmem>>, %arg7: memref<1x1xf32, #tpu.memory_space<smem>>, %arg8: memref<1x128xf32, #tpu.memory_space<vmem>>) attributes {dimension_semantics = [#tpu.dimension_semantics<parallel>], iteration_bounds = array<i64: 1>, scalar_prefetch = 0 : i64, scratch_operands = 0 : i64, tpu.core_type = #tpu.core_type<tc>, window_params = [{transform_indices = @transform_0, window_bounds = array<i64: 128, 16>}, {transform_indices = @transform_1, window_bounds = array<i64: 128, 16>}, {pipeline_mode = #tpu.pipeline_mode<synchronous>, transform_indices = @transform_2, window_bounds = array<i64: 32, 16>}, {pipeline_mode = #tpu.pipeline_mode<synchronous>, transform_indices = @transform_3, window_bounds = array<i64: 32, 16>}, {pipeline_mode = #tpu.pipeline_mode<synchronous>, transform_indices = @transform_4, window_bounds = array<i64: 32, 1>}, {pipeline_mode = #tpu.pipeline_mode<synchronous>, transform_indices = @transform_5, window_bounds = array<i64: 32, 1>}, {transform_indices = @transform_6, window_bounds = array<i64: 1, 1>}, {transform_indices = @transform_7, window_bounds = array<i64: 1, 128>}]} {
    %c0 = arith.constant 0 : index
    %c0_0 = arith.constant 0 : index
    %0 = vector.load %arg3[%c0, %c0_0] : memref<32x16xf32, #tpu.memory_space<vmem>>, vector<32x16xf32>
    %c0_1 = arith.constant 0 : index
    %c0_2 = arith.constant 0 : index
    %1 = vector.load %arg1[%c0_1, %c0_2] : memref<128x16xf32, #tpu.memory_space<vmem>>, vector<128x16xf32>
    %cst = arith.constant dense<0.000000e+00> : vector<32x128xf32>
    %2 = tpu.matmul %0, %1, %cst {dimension_numbers = #tpu.dot_dimension_numbers<[1], [1], [0], [0], [0, 0, 1, 0], [], []>} : vector<32x16xf32>, vector<128x16xf32>, vector<32x128xf32> -> vector<32x128xf32>
    %c0_3 = arith.constant 0 : index
    %c0_4 = arith.constant 0 : index
    %3 = vector.load %arg4[%c0_3, %c0_4] : memref<32x16xf32, #tpu.memory_space<vmem>>, vector<32x16xf32>
    %c0_5 = arith.constant 0 : index
    %c0_6 = arith.constant 0 : index
    %4 = vector.load %arg2[%c0_5, %c0_6] : memref<128x16xf32, #tpu.memory_space<vmem>>, vector<128x16xf32>
    %cst_7 = arith.constant dense<0.000000e+00> : vector<32x128xf32>
    %5 = tpu.matmul %3, %4, %cst_7 {dimension_numbers = #tpu.dot_dimension_numbers<[1], [1], [0], [0], [0, 0, 1, 0], [], []>} : vector<32x16xf32>, vector<128x16xf32>, vector<32x128xf32> -> vector<32x128xf32>
    %6 = arith.addf %2, %5 : vector<32x128xf32>
    %c0_8 = arith.constant 0 : index
    %c0_9 = arith.constant 0 : index
    %7 = vector.load %arg5[%c0_8, %c0_9] : memref<32x1xf32, #tpu.memory_space<vmem>>, vector<32x1xf32>
    %8 = vector.broadcast %7 : vector<32x1xf32> to vector<32x128xf32>
    %9 = arith.addf %6, %8 : vector<32x128xf32>
    %cst_10 = arith.constant 0.000000e+00 : f32
    %10 = vector.broadcast %cst_10 : f32 to vector<32x128xf32>
    %11 = arith.maximumf %9, %10 : vector<32x128xf32>
    %c0_11 = arith.constant 0 : index
    %c0_12 = arith.constant 0 : index
    %12 = vector.load %arg6[%c0_11, %c0_12] : memref<32x1xf32, #tpu.memory_space<vmem>>, vector<32x1xf32>
    %13 = vector.broadcast %12 : vector<32x1xf32> to vector<32x128xf32>
    %14 = arith.mulf %11, %13 : vector<32x128xf32>
    %cst_13 = arith.constant dense<0.000000e+00> : vector<128xf32>
    %15 = vector.multi_reduction <add>, %14, %cst_13 [0] : vector<32x128xf32> to vector<128xf32>
    %16 = vector.shape_cast %15 : vector<128xf32> to vector<1x128xf32>
    %c0_14 = arith.constant 0 : index
    %c0_15 = arith.constant 0 : index
    %17 = memref.load %arg7[%c0_14, %c0_15] : memref<1x1xf32, #tpu.memory_space<smem>>
    %18 = vector.broadcast %17 : f32 to vector<1x128xf32>
    %19 = arith.addf %16, %18 : vector<1x128xf32>
    %c0_16 = arith.constant 0 : index
    %c0_17 = arith.constant 0 : index
    %20 = vector.load %arg8[%c0_16, %c0_17] : memref<1x128xf32, #tpu.memory_space<vmem>>, vector<1x128xf32>
    tpu.vector_store %arg8[%c0_16, %c0_17], %19 {strides = array<i32>} : memref<1x128xf32, #tpu.memory_space<vmem>>, vector<1x128xf32>,
    return
  }
  func.func @transform_0(%arg0: i32) -> (i32, i32) {
    %c0_i32 = arith.constant 0 : i32
    %c0_i32_0 = arith.constant 0 : i32
    return %arg0, %c0_i32 : i32, i32
  }
  func.func @transform_1(%arg0: i32) -> (i32, i32) {
    %c0_i32 = arith.constant 0 : i32
    %c0_i32_0 = arith.constant 0 : i32
    return %arg0, %c0_i32 : i32, i32
  }
  func.func @transform_2(%arg0: i32) -> (i32, i32) {
    %c0_i32 = arith.constant 0 : i32
    %c0_i32_0 = arith.constant 0 : i32
    %c0_i32_1 = arith.constant 0 : i32
    return %c0_i32, %c0_i32_0 : i32, i32
  }
  func.func @transform_3(%arg0: i32) -> (i32, i32) {
    %c0_i32 = arith.constant 0 : i32
    %c0_i32_0 = arith.constant 0 : i32
    %c0_i32_1 = arith.constant 0 : i32
    return %c0_i32, %c0_i32_0 : i32, i32
  }
  func.func @transform_4(%arg0: i32) -> (i32, i32) {
    %c0_i32 = arith.constant 0 : i32
    %c0_i32_0 = arith.constant 0 : i32
    %c0_i32_1 = arith.constant 0 : i32
    return %c0_i32, %c0_i32_0 : i32, i32
  }
  func.func @transform_5(%arg0: i32) -> (i32, i32) {
    %c0_i32 = arith.constant 0 : i32
    %c0_i32_0 = arith.constant 0 : i32
    %c0_i32_1 = arith.constant 0 : i32
    return %c0_i32, %c0_i32_0 : i32, i32
  }
  func.func @transform_6(%arg0: i32) -> (i32, i32) {
    %c0_i32 = arith.constant 0 : i32
    %c0_i32_0 = arith.constant 0 : i32
    %c0_i32_1 = arith.constant 0 : i32
    return %c0_i32, %c0_i32_0 : i32, i32
  }
  func.func @transform_7(%arg0: i32) -> (i32, i32) {
    %c0_i32 = arith.constant 0 : i32
    %c0_i32_0 = arith.constant 0 : i32
    return %c0_i32, %arg0 : i32, i32
  }
}

</mosaic_0001>

<llo_original>
// kernel: tpu_custom_call.1
$region0: #{tpu_custom_call.1}
  #allocation0 [shape = 'u32[]', space=smem, size = 0x4, offset = 0x4, fixed_abs, tag = 'smem constant byte address 0x4 - core index']
  #allocation1 [shape = 'u32[144,128]{1,0:T(1,128)}', space=vmem, size = 0x12000, scoped, tag = 'internal scratch']
  #allocation2 [shape = 'f32[1,1]{1,0:T(1,128)S(6)}', space=smem, size = 0x200, scoped, tag = 'scoped memory for tpu_custom_call.1']
  %s0 = inlined_call_operand.vmem [shape: f32[128,16], index: 0, kind: input, shape index: {}]
  %s1 = inlined_call_operand.vmem [shape: f32[128,16], index: 1, kind: input, shape index: {}]
  %s2 = inlined_call_operand.vmem [shape: f32[32,16], index: 2, kind: input, shape index: {}]
  %s3 = inlined_call_operand.vmem [shape: f32[32,16], index: 3, kind: input, shape index: {}]
  %s4 = inlined_call_operand.vmem [shape: f32[32,1], index: 4, kind: input, shape index: {}]
  %s5 = inlined_call_operand.vmem [shape: f32[32,1], index: 5, kind: input, shape index: {}]
  %s6 = inlined_call_operand.<no memory space> [shape: f32[1,1], index: 6, kind: input, shape index: {}]
  %s7 = inlined_call_operand.hbm [shape: f32[1,128], index: 7, kind: output, shape index: {}]
  %s8 = sld [smem:[#allocation0]]
  $region38: #{tpu_custom_call.1} parent=0
    _
  %s10 = ssub.s32 1, %s8
  %s11 = scalar_select 0, %s10, %s8
  %12 = sst [smem:[#allocation2]] %s6
  $region1: #{tpu_custom_call.1} parent=0
    #allocation3 [shape = 'u8[512]{0}', space=vmem, size = 0x400, scoped, tag = 'output window, operand 0, single buffered']
    #allocation4 [shape = 's32[1]{0}', space=sflag, size = 0x4, scoped, tag = 'scoped memory for tpu_custom_call.1']
    %13 = vsyncpa [#allocation4], 0
    // Predicated region
    $region2: #{tpu_custom_call.1} parent=1 // pred_check
      _
    $region3: #{tpu_custom_call.1} parent=1 // pred_check_branch
      %15 = sbr.rel (0) target = $region5
    $region4: #{tpu_custom_call.1} parent=1 // pred_region
      _
    $region5: #{tpu_custom_call.1} parent=1 // pred_fallthru
      _
    // Predicated region
    $region6: #{tpu_custom_call.1} parent=1 // pred_check
      _
    $region7: #{tpu_custom_call.1} parent=1 // pred_check_branch
      %17 = sbr.rel (0) target = $region9
    $region8: #{tpu_custom_call.1} parent=1 // pred_region
      _
    $region9: #{tpu_custom_call.1} parent=1 // pred_fallthru
      _
    // Predicated region
    $region10: #{tpu_custom_call.1} parent=1 // pred_check
      _
    $region11: #{tpu_custom_call.1} parent=1 // pred_check_branch
      %19 = sbr.rel (0) target = $region13
    $region12: #{tpu_custom_call.1} parent=1 // pred_region
      _
    $region13: #{tpu_custom_call.1} parent=1 // pred_fallthru
      _
    // Predicated region
    $region14: #{tpu_custom_call.1} parent=1 // pred_check
      _
    $region15: #{tpu_custom_call.1} parent=1 // pred_check_branch
      %21 = sbr.rel (0) target = $region17
    $region16: #{tpu_custom_call.1} parent=1 // pred_region
      _
    $region17: #{tpu_custom_call.1} parent=1 // pred_fallthru
      _
    // Predicated region
    $region18: #{tpu_custom_call.1} parent=1 // pred_check
      _
    $region19: #{tpu_custom_call.1} parent=1 // pred_check_branch
      %23 = sbr.rel (0) target = $region21
    $region20: #{tpu_custom_call.1} parent=1 // pred_region
      _
    $region21: #{tpu_custom_call.1} parent=1 // pred_fallthru
      _
    // Predicated region
    $region22: #{tpu_custom_call.1} parent=1 // pred_check
      _
    $region23: #{tpu_custom_call.1} parent=1 // pred_check_branch
      %25 = sbr.rel (0) target = $region25
    $region24: #{tpu_custom_call.1} parent=1 // pred_region
      _
    $region25: #{tpu_custom_call.1} parent=1 // pred_fallthru
      _
    // Predicated region
    $region26: #{tpu_custom_call.1} parent=1 // pred_check
      _
    $region27: #{tpu_custom_call.1} parent=1 // pred_check_branch
      %27 = sbr.rel (0) target = $region29
    $region28: #{tpu_custom_call.1} parent=1 // pred_region
      _
    $region29: #{tpu_custom_call.1} parent=1 // pred_fallthru
      _
    %v28 = vld [vmem:[%s2] sm:$0xff]
    %v29 = vld [vmem:[%s2 + $0x8] sm:$0xff]
    %v30 = vld [vmem:[%s2 + $0x10] sm:$0xff]
    %v31 = vld [vmem:[%s2 + $0x18] sm:$0xff]
    %v32 = vld [vmem:[%s0] sm:$0xff]
    %v33 = vld [vmem:[%s0 + $0x8] sm:$0xff]
    %v34 = vld [vmem:[%s0 + $0x10] sm:$0xff]
    %v35 = vld [vmem:[%s0 + $0x18] sm:$0xff]
    %v36 = vld [vmem:[%s0 + $0x20] sm:$0xff]
    %v37 = vld [vmem:[%s0 + $0x28] sm:$0xff]
    %v38 = vld [vmem:[%s0 + $0x30] sm:$0xff]
    %v39 = vld [vmem:[%s0 + $0x38] sm:$0xff]
    %v40 = vld [vmem:[%s0 + $0x40] sm:$0xff]
    %v41 = vld [vmem:[%s0 + $0x48] sm:$0xff]
    %v42 = vld [vmem:[%s0 + $0x50] sm:$0xff]
    %v43 = vld [vmem:[%s0 + $0x58] sm:$0xff]
    %v44 = vld [vmem:[%s0 + $0x60] sm:$0xff]
    %v45 = vld [vmem:[%s0 + $0x68] sm:$0xff]
    %v46 = vld [vmem:[%s0 + $0x70] sm:$0xff]
    %v47 = vld [vmem:[%s0 + $0x78] sm:$0xff]
    %v48 = vld [vmem:[%s3] sm:$0xff]
    %v49 = vld [vmem:[%s3 + $0x8] sm:$0xff]
    %v50 = vld [vmem:[%s3 + $0x10] sm:$0xff]
    %v51 = vld [vmem:[%s3 + $0x18] sm:$0xff]
    %v52 = vld [vmem:[%s1] sm:$0xff]
    %v53 = vld [vmem:[%s1 + $0x8] sm:$0xff]
    %v54 = vld [vmem:[%s1 + $0x10] sm:$0xff]
    %v55 = vld [vmem:[%s1 + $0x18] sm:$0xff]
    %v56 = vld [vmem:[%s1 + $0x20] sm:$0xff]
    %v57 = vld [vmem:[%s1 + $0x28] sm:$0xff]
    %v58 = vld [vmem:[%s1 + $0x30] sm:$0xff]
    %v59 = vld [vmem:[%s1 + $0x38] sm:$0xff]
    %v60 = vld [vmem:[%s1 + $0x40] sm:$0xff]
    %v61 = vld [vmem:[%s1 + $0x48] sm:$0xff]
    %v62 = vld [vmem:[%s1 + $0x50] sm:$0xff]
    %v63 = vld [vmem:[%s1 + $0x58] sm:$0xff]
    %v64 = vld [vmem:[%s1 + $0x60] sm:$0xff]
    %v65 = vld [vmem:[%s1 + $0x68] sm:$0xff]
    %v66 = vld [vmem:[%s1 + $0x70] sm:$0xff]
    %v67 = vld [vmem:[%s1 + $0x78] sm:$0xff]
    %vm68 = vcmask 130048
    %v70 = vsel %vm68, %v48, 0
    %v73 = vsel %vm68, %v49, 0
    %v76 = vsel %vm68, %v50, 0
    %v79 = vsel %vm68, %v51, 0
    %v82 = vsel %vm68, %v52, 0
    %v85 = vsel %vm68, %v53, 0
    %v88 = vsel %vm68, %v54, 0
    %v91 = vsel %vm68, %v55, 0
    %v94 = vsel %vm68, %v56, 0
    %v97 = vsel %vm68, %v57, 0
    %v100 = vsel %vm68, %v58, 0
    %v103 = vsel %vm68, %v59, 0
    %v106 = vsel %vm68, %v60, 0
    %v109 = vsel %vm68, %v61, 0
    %v112 = vsel %vm68, %v62, 0
    %v115 = vsel %vm68, %v63, 0
    %v118 = vsel %vm68, %v64, 0
    %v121 = vsel %vm68, %v65, 0
    %v124 = vsel %vm68, %v66, 0
    %v127 = vsel %vm68, %v67, 0
    %129 = vmatprep.subr.mxu0 0.0
    %130 = vmatpush1.xpose.msra.mxu0 %v127
    %131 = vmatprep.subr.mxu0 0.0
    %132 = vmatpush1.xpose.msra.mxu0 %v124
    %133 = vmatprep.subr.mxu0 0.0
    %134 = vmatpush1.xpose.msra.mxu0 %v121
    %135 = vmatprep.subr.mxu0 0.0
    %136 = vmatpush1.xpose.msra.mxu0 %v118
    %137 = vmatprep.subr.mxu0 0.0
    %138 = vmatpush1.xpose.msra.mxu0 %v115
    %139 = vmatprep.subr.mxu0 0.0
    %140 = vmatpush1.xpose.msra.mxu0 %v112
    %141 = vmatprep.subr.mxu0 0.0
    %142 = vmatpush1.xpose.msra.mxu0 %v109
    %143 = vmatprep.subr.mxu0 0.0
    %144 = vmatpush1.xpose.msra.mxu0 %v106
    %145 = vmatprep.subr.mxu0 0.0
    %146 = vmatpush1.xpose.msra.mxu0 %v103
    %147 = vmatprep.subr.mxu0 0.0
    %148 = vmatpush1.xpose.msra.mxu0 %v100
    %149 = vmatprep.subr.mxu0 0.0
    %150 = vmatpush1.xpose.msra.mxu0 %v97
    %151 = vmatprep.subr.mxu0 0.0
    %152 = vmatpush1.xpose.msra.mxu0 %v94
    %153 = vmatprep.subr.mxu0 0.0
    %154 = vmatpush1.xpose.msra.mxu0 %v91
    %155 = vmatprep.subr.mxu0 0.0
    %156 = vmatpush1.xpose.msra.mxu0 %v88
    %157 = vmatprep.subr.mxu0 0.0
    %158 = vmatpush1.xpose.msra.mxu0 %v85
    %159 = vmatprep.subr.mxu0 0.0
    %160 = vmatpush1.xpose.msra.mxu0 %v82
    %161 = vmatprep.subr.mxu0 0.0
    %162 = vmatpush2.xpose.msra.mxu0 0.0
    %163 = vmatprep.subr.mxu0 0.0
    %164 = vmatpush2.xpose.msra.mxu0 0.0
    %165 = vmatprep.subr.mxu0 0.0
    %166 = vmatpush2.xpose.msra.mxu0 0.0
    %167 = vmatprep.subr.mxu0 0.0
    %168 = vmatpush2.xpose.msra.mxu0 0.0
    %169 = vmatprep.subr.mxu0 0.0
    %170 = vmatpush2.xpose.msra.mxu0 0.0
    %171 = vmatprep.subr.mxu0 0.0
    %172 = vmatpush2.xpose.msra.mxu0 0.0
    %173 = vmatprep.subr.mxu0 0.0
    %174 = vmatpush2.xpose.msra.mxu0 0.0
    %175 = vmatprep.subr.mxu0 0.0
    %176 = vmatpush2.xpose.msra.mxu0 0.0
    %177 = vmatprep.subr.mxu0 0.0
    %178 = vmatpush2.xpose.msra.mxu0 0.0
    %179 = vmatprep.subr.mxu0 0.0
    %180 = vmatpush2.xpose.msra.mxu0 0.0
    %181 = vmatprep.subr.mxu0 0.0
    %182 = vmatpush2.xpose.msra.mxu0 0.0
    %183 = vmatprep.subr.mxu0 0.0
    %184 = vmatpush2.xpose.msra.mxu0 0.0
    %185 = vmatprep.subr.mxu0 0.0
    %186 = vmatpush2.xpose.msra.mxu0 0.0
    %187 = vmatprep.subr.mxu0 0.0
    %188 = vmatpush2.xpose.msra.mxu0 0.0
    %189 = vmatprep.subr.mxu0 0.0
    %190 = vmatpush2.xpose.msra.mxu0 0.0
    %191 = vmatprep.subr.mxu0 0.0
    %192 = vmatpush2.xpose.msra.mxu0 0.0
    %193 = vmatprep.mubr.f32.mxu0 0.0
    %194 = vmatmul.mubr.f32.gmra.mxu0 %v70
    %v195 = vpop.f32.mrf.mxu0
    %v196 = vadd.f32 0.0, %v195
    %v197 = vpop.f32.mrf.mxu0
    %198 = vmatprep.mubr.f32.mxu0 0.0
    %199 = vmatmul.mubr.f32.gmra.mxu0 %v73
    %v200 = vpop.f32.mrf.mxu0
    %v201 = vadd.f32 0.0, %v200
    %v202 = vpop.f32.mrf.mxu0
    %203 = vmatprep.mubr.f32.mxu0 0.0
    %204 = vmatmul.mubr.f32.gmra.mxu0 %v76
    %v205 = vpop.f32.mrf.mxu0
    %v206 = vadd.f32 0.0, %v205
    %v207 = vpop.f32.mrf.mxu0
    %208 = vmatprep.mubr.f32.mxu0 0.0
    %209 = vmatmul.mubr.f32.gmra.mxu0 %v79
    %v210 = vpop.f32.mrf.mxu0
    %v211 = vadd.f32 0.0, %v210
    %v212 = vpop.f32.mrf.mxu0
    %213 = vdwg.mxu0
    %v215 = vsel %vm68, %v28, 0
    %v218 = vsel %vm68, %v29, 0
    %v221 = vsel %vm68, %v30, 0
    %v224 = vsel %vm68, %v31, 0
    %v227 = vsel %vm68, %v32, 0
    %v230 = vsel %vm68, %v33, 0
    %v233 = vsel %vm68, %v34, 0
    %v236 = vsel %vm68, %v35, 0
    %v239 = vsel %vm68, %v36, 0
    %v242 = vsel %vm68, %v37, 0
    %v245 = vsel %vm68, %v38, 0
    %v248 = vsel %vm68, %v39, 0
    %v251 = vsel %vm68, %v40, 0
    %v254 = vsel %vm68, %v41, 0
    %v257 = vsel %vm68, %v42, 0
    %v260 = vsel %vm68, %v43, 0
    %v263 = vsel %vm68, %v44, 0
    %v266 = vsel %vm68, %v45, 0
    %v269 = vsel %vm68, %v46, 0
    %v272 = vsel %vm68, %v47, 0
    %274 = vmatprep.subr.mxu0 0.0
    %275 = vmatpush1.xpose.msra.mxu0 %v272
    %276 = vmatprep.subr.mxu0 0.0
    %277 = vmatpush1.xpose.msra.mxu0 %v269
    %278 = vmatprep.subr.mxu0 0.0
    %279 = vmatpush1.xpose.msra.mxu0 %v266
    %280 = vmatprep.subr.mxu0 0.0
    %281 = vmatpush1.xpose.msra.mxu0 %v263
    %282 = vmatprep.subr.mxu0 0.0
    %283 = vmatpush1.xpose.msra.mxu0 %v260
    %284 = vmatprep.subr.mxu0 0.0
    %285 = vmatpush1.xpose.msra.mxu0 %v257
    %286 = vmatprep.subr.mxu0 0.0
    %287 = vmatpush1.xpose.msra.mxu0 %v254
    %288 = vmatprep.subr.mxu0 0.0
    %289 = vmatpush1.xpose.msra.mxu0 %v251
    %290 = vmatprep.subr.mxu0 0.0
    %291 = vmatpush1.xpose.msra.mxu0 %v248
    %292 = vmatprep.subr.mxu0 0.0
    %293 = vmatpush1.xpose.msra.mxu0 %v245
    %294 = vmatprep.subr.mxu0 0.0
    %295 = vmatpush1.xpose.msra.mxu0 %v242
    %296 = vmatprep.subr.mxu0 0.0
    %297 = vmatpush1.xpose.msra.mxu0 %v239
    %298 = vmatprep.subr.mxu0 0.0
    %299 = vmatpush1.xpose.msra.mxu0 %v236
    %300 = vmatprep.subr.mxu0 0.0
    %301 = vmatpush1.xpose.msra.mxu0 %v233
    %302 = vmatprep.subr.mxu0 0.0
    %303 = vmatpush1.xpose.msra.mxu0 %v230
    %304 = vmatprep.subr.mxu0 0.0
    %305 = vmatpush1.xpose.msra.mxu0 %v227
    %306 = vmatprep.subr.mxu0 0.0
    %307 = vmatpush2.xpose.msra.mxu0 0.0
    %308 = vmatprep.subr.mxu0 0.0
    %309 = vmatpush2.xpose.msra.mxu0 0.0
    %310 = vmatprep.subr.mxu0 0.0
    %311 = vmatpush2.xpose.msra.mxu0 0.0
    %312 = vmatprep.subr.mxu0 0.0
    %313 = vmatpush2.xpose.msra.mxu0 0.0
    %314 = vmatprep.subr.mxu0 0.0
    %315 = vmatpush2.xpose.msra.mxu0 0.0
    %316 = vmatprep.subr.mxu0 0.0
    %317 = vmatpush2.xpose.msra.mxu0 0.0
    %318 = vmatprep.subr.mxu0 0.0
    %319 = vmatpush2.xpose.msra.mxu0 0.0
    %320 = vmatprep.subr.mxu0 0.0
    %321 = vmatpush2.xpose.msra.mxu0 0.0
    %322 = vmatprep.subr.mxu0 0.0
    %323 = vmatpush2.xpose.msra.mxu0 0.0
    %324 = vmatprep.subr.mxu0 0.0
    %325 = vmatpush2.xpose.msra.mxu0 0.0
    %326 = vmatprep.subr.mxu0 0.0
    %327 = vmatpush2.xpose.msra.mxu0 0.0
    %328 = vmatprep.subr.mxu0 0.0
    %329 = vmatpush2.xpose.msra.mxu0 0.0
    %330 = vmatprep.subr.mxu0 0.0
    %331 = vmatpush2.xpose.msra.mxu0 0.0
    %332 = vmatprep.subr.mxu0 0.0
    %333 = vmatpush2.xpose.msra.mxu0 0.0
    %334 = vmatprep.subr.mxu0 0.0
    %335 = vmatpush2.xpose.msra.mxu0 0.0
    %336 = vmatprep.subr.mxu0 0.0
    %337 = vmatpush2.xpose.msra.mxu0 0.0
    %338 = vmatprep.mubr.f32.mxu0 0.0
    %339 = vmatmul.mubr.f32.gmra.mxu0 %v215
    %v340 = vpop.f32.mrf.mxu0
    %v341 = vadd.f32 %v196, %v340
    %v342 = vpop.f32.mrf.mxu0
    %343 = vmatprep.mubr.f32.mxu0 0.0
    %344 = vmatmul.mubr.f32.gmra.mxu0 %v218
    %v345 = vpop.f32.mrf.mxu0
    %v346 = vadd.f32 %v201, %v345
    %v347 = vpop.f32.mrf.mxu0
    %348 = vmatprep.mubr.f32.mxu0 0.0
    %349 = vmatmul.mubr.f32.gmra.mxu0 %v221
    %v350 = vpop.f32.mrf.mxu0
    %v351 = vadd.f32 %v206, %v350
    %v352 = vpop.f32.mrf.mxu0
    %353 = vmatprep.mubr.f32.mxu0 0.0
    %354 = vmatmul.mubr.f32.gmra.mxu0 %v224
    %v355 = vpop.f32.mrf.mxu0
    %v356 = vadd.f32 %v211, %v355
    %v357 = vpop.f32.mrf.mxu0
    %358 = vdwg.mxu0
    %v359 = vld [vmem:[%s4] sm:$0xff]
    %v360 = vld [vmem:[%s4 + $0x8] sm:$0xff]
    %v361 = vld [vmem:[%s4 + $0x10] sm:$0xff]
    %v362 = vld [vmem:[%s4 + $0x18] sm:$0xff]
    %364 = vset.pattern.permute.xlu0 0
    %365 = vperm.xlu0 %364, %v359
    %v366 = vpop.permute.xlu0 %365
    %369 = vset.pattern.permute.xlu0 0
    %370 = vperm.xlu0 %369, %v360
    %v371 = vpop.permute.xlu0 %370
    %374 = vset.pattern.permute.xlu0 0
    %375 = vperm.xlu0 %374, %v361
    %v376 = vpop.permute.xlu0 %375
    %379 = vset.pattern.permute.xlu0 0
    %380 = vperm.xlu0 %379, %v362
    %v381 = vpop.permute.xlu0 %380
    %v383 = vadd.f32 %v341, %v366
    %v384 = vadd.f32 %v346, %v371
    %v385 = vadd.f32 %v351, %v376
    %v386 = vadd.f32 %v356, %v381
    %v387 = vmax.f32 %v383, 0.0
    %v388 = vmax.f32 %v384, 0.0
    %v389 = vmax.f32 %v385, 0.0
    %v390 = vmax.f32 %v386, 0.0
    %v391 = vld [vmem:[%s5] sm:$0xff]
    %v392 = vld [vmem:[%s5 + $0x8] sm:$0xff]
    %v393 = vld [vmem:[%s5 + $0x10] sm:$0xff]
    %v394 = vld [vmem:[%s5 + $0x18] sm:$0xff]
    %396 = vset.pattern.permute.xlu0 0
    %397 = vperm.xlu0 %396, %v391
    %v398 = vpop.permute.xlu0 %397
    %401 = vset.pattern.permute.xlu0 0
    %402 = vperm.xlu0 %401, %v392
    %v403 = vpop.permute.xlu0 %402
    %406 = vset.pattern.permute.xlu0 0
    %407 = vperm.xlu0 %406, %v393
    %v408 = vpop.permute.xlu0 %407
    %411 = vset.pattern.permute.xlu0 0
    %412 = vperm.xlu0 %411, %v394
    %v413 = vpop.permute.xlu0 %412
    %v415 = vmul.f32 %v387, %v398
    %v416 = vmul.f32 %v388, %v403
    %v417 = vmul.f32 %v389, %v408
    %v418 = vmul.f32 %v390, %v413
    %v419 = vadd.f32 %v415, %v416
    %v420 = vadd.f32 %v419, %v417
    %v421 = vadd.f32 %v420, %v418
    %v422 = vrot.slane %v421, 4
    %v423 = vadd.f32 %v421, %v422
    %v424 = vrot.slane %v423, 2
    %v425 = vadd.f32 %v423, %v424
    %v426 = vrot.slane %v425, 1
    %v427 = vadd.f32 %v425, %v426
    %s428 = sld [smem:[#allocation2]]
    %v429 = vstv %s428
    %v430 = vadd.f32 %v427, %v429
    %431 = vst [vmem:[#allocation3] sm:$0x1] %v430
    // Predicated region
    $region30: #{tpu_custom_call.1} parent=1 // pred_check
      _
    $region31: #{tpu_custom_call.1} parent=1 // pred_check_branch
      %433 = sbr.rel (0) target = $region33
    $region32: #{tpu_custom_call.1} parent=1 // pred_region
      %s435 = ssub.s32 16, 16
      %436 = vsyncadd [#allocation4], %s435
      %s438 = sshll.u32 [#allocation3], 4
      %s439 = int_to_ptr.vmem [resolvable:$true] %s438
      %441 = dma.vmem_to_hbm [thread:$0]  %s439, 16, %s7, [#allocation4]
    $region33: #{tpu_custom_call.1} parent=1 // pred_fallthru
      _
    // Predicated region
    $region34: #{tpu_custom_call.1} parent=1 // pred_check
      _
    $region35: #{tpu_custom_call.1} parent=1 // pred_check_branch
      %443 = sbr.rel (0) target = $region37
    $region36: #{tpu_custom_call.1} parent=1 // pred_region
      %444 = dma.done [#allocation4], 16
    $region37: #{tpu_custom_call.1} parent=1 // pred_fallthru
      _
    %445 = vsyncpa [#allocation4], 1

</llo_original>
